<compile_context>
chip_gen: v7x
topology: tpu7x:2x2x1
jax: 0.10.0
libtpu: 0.0.40
codegen_flags: <defaults>
</compile_context>

<pallas_src>
import jax
import jax.numpy as jnp
from jax.experimental import pallas as pl
from jax.experimental.pallas import tpu as pltpu


_LANE = 128
_VMEM_TILE_BUDGET = 20 * 1024 * 1024  # fits default scoped VMEM on all gens


def _skip_conv_kernel(x_ref, y_ref, wx_ref, wy_ref, o_ref):
    # x_ref, y_ref : (C, T)  channels x spatial tile (lane-dense spatial)
    # wx_ref, wy_ref: (C, C) halves of the 1x1 conv weight (grid-resident)
    # o_ref        : (C, T)
    # out = W[:, :C] @ x + W[:, C:] @ y   (== 1x1 conv of cat([x, y], channel))
    acc = jnp.dot(wx_ref[...], x_ref[...], preferred_element_type=jnp.float32)
    acc = acc + jnp.dot(wy_ref[...], y_ref[...],
                        preferred_element_type=jnp.float32)
    o_ref[...] = acc.astype(o_ref.dtype)


def skip_connection_pallas(x_nchw, y_nchw, weight, *, tile_hw=None,
                           compute_dtype=None):
    """SkipConnection.forward: conv1x1(cat([x, y], dim=1)), no bias.

    x_nchw, y_nchw : (N, C, H, W)
    weight         : (C, 2C)  == torch Conv2d(2C, C, 1, bias=False).weight[:, :, 0, 0]
    compute_dtype  : optional dtype (e.g. jnp.bfloat16) to stream inputs/weights in;
                     accumulation stays f32, output keeps the input dtype.
    """
    N, C, H, W = x_nchw.shape
    assert y_nchw.shape == (N, C, H, W)
    assert weight.shape == (C, 2 * C)
    HW = H * W
    out_dtype = x_nchw.dtype

    # Channels-by-spatial view: pure reshape, no transpose, no extra HBM pass.
    x3 = x_nchw.reshape(N, C, HW)
    y3 = y_nchw.reshape(N, C, HW)
    wx = weight[:, :C]   # (C, C) weights applied to the x half of the concat
    wy = weight[:, C:]   # (C, C) weights applied to the y half

    if compute_dtype is not None:
        x3 = x3.astype(compute_dtype)
        y3 = y3.astype(compute_dtype)
        wx = wx.astype(compute_dtype)
        wy = wy.astype(compute_dtype)

    in_bytes = jnp.dtype(x3.dtype).itemsize
    out_bytes = jnp.dtype(out_dtype).itemsize

    if tile_hw is None:
        # Per-step VMEM ~= 2 (double buffer) * (x + y + out) tiles + weights.
        per_col = 2 * (2 * C * in_bytes + C * out_bytes)
        w_bytes = 2 * C * C * in_bytes
        max_cols = max(_LANE, (_VMEM_TILE_BUDGET - w_bytes) // max(per_col, 1))
        tile_hw = min(2048, max_cols, HW)

    tile_hw = min(tile_hw, HW)
    if tile_hw < HW:
        # (8,128) rule: a partial spatial tile must be a lane multiple.
        tile_hw = max(_LANE, (tile_hw // _LANE) * _LANE)
    # Keep at least 2 parallel grid steps so both v7x TensorCores get work.
    if N * pl.cdiv(HW, tile_hw) < 2 and tile_hw > _LANE:
        tile_hw = max(_LANE, ((tile_hw // 2) // _LANE) * _LANE)

    grid = (N, pl.cdiv(HW, tile_hw))

    out3 = pl.pallas_call(
        _skip_conv_kernel,
        out_shape=jax.ShapeDtypeStruct((N, C, HW), out_dtype),
        grid_spec=pltpu.PrefetchScalarGridSpec(
            num_scalar_prefetch=0,
            grid=grid,
            in_specs=[
                pl.BlockSpec((None, C, tile_hw), lambda n, s: (n, 0, s)),  # x
                pl.BlockSpec((None, C, tile_hw), lambda n, s: (n, 0, s)),  # y
                pl.BlockSpec((C, C), lambda n, s: (0, 0)),                 # Wx
                pl.BlockSpec((C, C), lambda n, s: (0, 0)),                 # Wy
            ],
            out_specs=pl.BlockSpec((None, C, tile_hw), lambda n, s: (n, 0, s)),
        ),
        compiler_params=pltpu.CompilerParams(
            dimension_semantics=("parallel", "parallel"),
            vmem_limit_bytes=32 * 1024 * 1024,
        ),
    )(x3, y3, wx, wy)

    return out3.reshape(N, C, H, W)


def _reference(x_nchw, y_nchw, weight):
    """Pure-JAX reference matching torch: conv1x1(cat([x, y], dim=1))."""
    cat = jnp.concatenate([x_nchw, y_nchw], axis=1)          # (N, 2C, H, W)
    return jnp.einsum("oc,nchw->nohw", weight, cat)


if __name__ == "__main__":
    key = jax.random.PRNGKey(0)
    kx, ky, kw = jax.random.split(key, 3)

    N, C, H, W = 2, 4, 16, 16
    x = jax.random.normal(kx, (N, C, H, W), dtype=jnp.float32)
    y = jax.random.normal(ky, (N, C, H, W), dtype=jnp.float32)

    # Deterministic Conv2d(2C, C, 1, bias=False) weight, squeezed to (C, 2C).
    fan_in = 2 * C
    bound = 1.0 / (fan_in ** 0.5)
    weight = jax.random.uniform(kw, (C, 2 * C), minval=-bound, maxval=bound,
                                dtype=jnp.float32)

    ref = _reference(x, y, weight)

    # f32 streaming path.
    out = jax.block_until_ready(skip_connection_pallas(x, y, weight))
    assert out.shape == (N, C, H, W)
    assert jnp.allclose(out, ref, atol=1e-5, rtol=1e-5), "f32 mismatch vs reference"

    # bf16 streaming path (halved HBM traffic, f32 accumulation) — looser tol.
    out_bf16 = jax.block_until_ready(
        skip_connection_pallas(x, y, weight, compute_dtype=jnp.bfloat16))
    assert out_bf16.shape == (N, C, H, W)
    assert jnp.allclose(out_bf16, ref, atol=3e-2, rtol=3e-2), "bf16 mismatch vs reference"

    print("KERNEL_OK")
</pallas_src>

<mosaic_0001>
module attributes {stable_mosaic.version = 11 : i64} {
  func.func @_skip_conv_kernel(%arg0: i32, %arg1: i32, %arg2: memref<1x4x256xf32, #tpu.memory_space<vmem>>, %arg3: memref<1x4x256xf32, #tpu.memory_space<vmem>>, %arg4: memref<4x4xf32, #tpu.memory_space<vmem>>, %arg5: memref<4x4xf32, #tpu.memory_space<vmem>>, %arg6: memref<1x4x256xf32, #tpu.memory_space<vmem>>) attributes {dimension_semantics = [#tpu.dimension_semantics<parallel>, #tpu.dimension_semantics<parallel>], iteration_bounds = array<i64: 2, 1>, scalar_prefetch = 0 : i64, scratch_operands = 0 : i64, tpu.core_type = #tpu.core_type<tc>, window_params = [{transform_indices = @transform_0, window_bounds = array<i64: 1, 4, 256>}, {transform_indices = @transform_1, window_bounds = array<i64: 1, 4, 256>}, {pipeline_mode = #tpu.pipeline_mode<synchronous>, transform_indices = @transform_2, window_bounds = array<i64: 4, 4>}, {pipeline_mode = #tpu.pipeline_mode<synchronous>, transform_indices = @transform_3, window_bounds = array<i64: 4, 4>}, {transform_indices = @transform_4, window_bounds = array<i64: 1, 4, 256>}]} {
    %c0 = arith.constant 0 : index
    %c0_0 = arith.constant 0 : index
    %0 = vector.load %arg4[%c0, %c0_0] : memref<4x4xf32, #tpu.memory_space<vmem>>, vector<4x4xf32>
    %c0_1 = arith.constant 0 : index
    %c0_2 = arith.constant 0 : index
    %c0_3 = arith.constant 0 : index
    %1 = vector.load %arg2[%c0_1, %c0_2, %c0_3] : memref<1x4x256xf32, #tpu.memory_space<vmem>>, vector<1x4x256xf32>
    %2 = vector.shape_cast %1 : vector<1x4x256xf32> to vector<4x256xf32>
    %cst = arith.constant dense<0.000000e+00> : vector<4x256xf32>
    %3 = tpu.matmul %0, %2, %cst {dimension_numbers = #tpu.dot_dimension_numbers<[1], [0], [0], [1], [0, 0, 1, 1], [], []>} : vector<4x4xf32>, vector<4x256xf32>, vector<4x256xf32> -> vector<4x256xf32>
    %c0_4 = arith.constant 0 : index
    %c0_5 = arith.constant 0 : index
    %4 = vector.load %arg5[%c0_4, %c0_5] : memref<4x4xf32, #tpu.memory_space<vmem>>, vector<4x4xf32>
    %c0_6 = arith.constant 0 : index
    %c0_7 = arith.constant 0 : index
    %c0_8 = arith.constant 0 : index
    %5 = vector.load %arg3[%c0_6, %c0_7, %c0_8] : memref<1x4x256xf32, #tpu.memory_space<vmem>>, vector<1x4x256xf32>
    %6 = vector.shape_cast %5 : vector<1x4x256xf32> to vector<4x256xf32>
    %cst_9 = arith.constant dense<0.000000e+00> : vector<4x256xf32>
    %7 = tpu.matmul %4, %6, %cst_9 {dimension_numbers = #tpu.dot_dimension_numbers<[1], [0], [0], [1], [0, 0, 1, 1], [], []>} : vector<4x4xf32>, vector<4x256xf32>, vector<4x256xf32> -> vector<4x256xf32>
    %8 = arith.addf %3, %7 : vector<4x256xf32>
    %c0_10 = arith.constant 0 : index
    %c0_11 = arith.constant 0 : index
    %c0_12 = arith.constant 0 : index
    %9 = vector.load %arg6[%c0_10, %c0_11, %c0_12] : memref<1x4x256xf32, #tpu.memory_space<vmem>>, vector<1x4x256xf32>
    %10 = vector.shape_cast %9 : vector<1x4x256xf32> to vector<4x256xf32>
    %11 = vector.shape_cast %8 : vector<4x256xf32> to vector<1x4x256xf32>
    tpu.vector_store %arg6[%c0_10, %c0_11, %c0_12], %11 {strides = array<i32>} : memref<1x4x256xf32, #tpu.memory_space<vmem>>, vector<1x4x256xf32>,
    return
  }
  func.func @transform_0(%arg0: i32, %arg1: i32) -> (i32, i32, i32) {
    %c0_i32 = arith.constant 0 : i32
    %c0_i32_0 = arith.constant 0 : i32
    return %arg0, %c0_i32, %arg1 : i32, i32, i32
  }
  func.func @transform_1(%arg0: i32, %arg1: i32) -> (i32, i32, i32) {
    %c0_i32 = arith.constant 0 : i32
    %c0_i32_0 = arith.constant 0 : i32
    return %arg0, %c0_i32, %arg1 : i32, i32, i32
  }
  func.func @transform_2(%arg0: i32, %arg1: i32) -> (i32, i32) {
    %c0_i32 = arith.constant 0 : i32
    %c0_i32_0 = arith.constant 0 : i32
    %c0_i32_1 = arith.constant 0 : i32
    return %c0_i32, %c0_i32_0 : i32, i32
  }
  func.func @transform_3(%arg0: i32, %arg1: i32) -> (i32, i32) {
    %c0_i32 = arith.constant 0 : i32
    %c0_i32_0 = arith.constant 0 : i32
    %c0_i32_1 = arith.constant 0 : i32
    return %c0_i32, %c0_i32_0 : i32, i32
  }
  func.func @transform_4(%arg0: i32, %arg1: i32) -> (i32, i32, i32) {
    %c0_i32 = arith.constant 0 : i32
    %c0_i32_0 = arith.constant 0 : i32
    return %arg0, %c0_i32, %arg1 : i32, i32, i32
  }
}

</mosaic_0001>

<llo_original>
// kernel: tpu_custom_call.1
$region0: #{tpu_custom_call.1}
  #allocation0 [shape = 'u32[]', space=smem, size = 0x4, offset = 0x4, fixed_abs, tag = 'smem constant byte address 0x4 - core index']
  #allocation1 [shape = 'u32[144,128]{1,0:T(1,128)}', space=vmem, size = 0x12000, scoped, tag = 'internal scratch']
  %s0 = inlined_call_operand.hbm [shape: f32[2,4,256], index: 0, kind: input, shape index: {}]
  %s1 = inlined_call_operand.hbm [shape: f32[2,4,256], index: 1, kind: input, shape index: {}]
  %s2 = inlined_call_operand.vmem [shape: f32[4,4], index: 2, kind: input, shape index: {}]
  %s3 = inlined_call_operand.vmem [shape: f32[4,4], index: 3, kind: input, shape index: {}]
  %s4 = inlined_call_operand.hbm [shape: f32[2,4,256], index: 4, kind: output, shape index: {}]
  %s5 = sld [smem:[#allocation0]]
  $region57: #{tpu_custom_call.1} parent=0
    _
  %s7 = ssub.s32 1, %s5
  %s8 = scalar_select 0, %s7, %s5
  $region1: #{tpu_custom_call.1} parent=0
    #allocation2 [shape = 'u8[8192]{0}', space=vmem, size = 0x2000, scoped, tag = 'input window, operand 0']
    #allocation3 [shape = 's32[2]{0}', space=sflag, size = 0x8, scoped, tag = 'scoped memory for tpu_custom_call.1']
    #allocation4 [shape = 's32[2]{0}', space=sflag, size = 0x8, scoped, tag = 'scoped memory for tpu_custom_call.1']
    #allocation5 [shape = 'u8[8192]{0}', space=vmem, size = 0x2000, scoped, tag = 'input window, operand 1']
    #allocation6 [shape = 's32[2]{0}', space=sflag, size = 0x8, scoped, tag = 'scoped memory for tpu_custom_call.1']
    #allocation7 [shape = 'u8[8192]{0}', space=vmem, size = 0x2000, scoped, tag = 'output window, operand 0']
    %9 = vsyncpa [#allocation3], 0
    %s10 = scalar_lea.sflag [#allocation3], 1
    %11 = vsyncpa %s10, 0
    %12 = vsyncpa [#allocation6], 0
    %s13 = scalar_lea.sflag [#allocation6], 1
    %14 = vsyncpa %s13, 0
    %15 = vsyncpa [#allocation4], 0
    %s16 = scalar_lea.sflag [#allocation4], 1
    %17 = vsyncpa %s16, 0
    loop: start=0, step=1, limit=4
    $region2: #{tpu_custom_call.1} parent=1 // loop_pre_header
      _
    $region3: #{tpu_custom_call.1} parent=1 // loop_header
      %s19 = sphi 0, %s23
      %p20 = scmp.ge.s32.totalorder %s19, 4
      %s26 = sphi 0, %s38
      %s27 = sphi 0, %s34
      %s28 = sphi 0, %s26
      %s29 = sphi 0, %s27
      %s30 = sphi 0, %s28
      %s31 = sphi 0, %s29
      %s43 = sphi 0, %s45
      %s46 = sphi 0, %s43
      %s47 = sphi 0, %s46
      %s63 = sphi 0, %s47
      %s71 = sphi 0, %s73
      %s74 = sphi 0, %s71
      %s75 = sphi 0, %s74
      %s91 = sphi 0, %s75
      %s95 = sphi 0, %s95
      %s97 = sphi 0, %s95
      %s98 = sphi 0, %s97
      %s112 = sphi 0, %s98
      %s116 = sphi 0, %s116
      %s118 = sphi 0, %s116
      %s119 = sphi 0, %s118
      %s133 = sphi 0, %s119
      %s141 = sphi 0, %s143
      %s144 = sphi 0, %s141
      %s145 = sphi 0, %s144
      %s161 = sphi 0, %s145
    $region4: #{tpu_custom_call.1} parent=1 // loop_header_branch
      %22 = sbr.rel (%p20) target = $region8
    $region5: #{tpu_custom_call.1} parent=1 // loop_body
      %s24 = ssub.s32 %s19, 1
      %s25 = ssub.s32 %s19, 2
      %s32 = sadd.s32 1, %s27
      %p33 = scmp.ge.s32.totalorder %s32, 1
      %s34 = scalar_select %p33, 0, %s32
      %s35 = sadd.s32 1, %s26
      %s36 = scalar_select %p33, %s35, %s26
      %p37 = scmp.ge.s32.totalorder %s36, 2
      %s38 = scalar_select %p37, 0, %s36
      %s39 = ssub.s32 %s26, %s38
      %s40 = ssub.s32 %s27, %s34
      %s41 = sor.u32 %s39, %s40
      %p42 = scmp.eq.s32.totalorder %s41, 0
      %s44 = sadd.s32 %s43, 1
      %s45 = scalar_select %p42, %s43, %s44
      %p48 = pneg %p42
      %p49 = scmp.eq.s32.totalorder %s19, 1
      %p50 = por %p48, %p49
      %p51 = scmp.ne.s32.totalorder %s43, %s46
      %p52 = scmp.eq.s32.totalorder %s19, 0
      %p53 = por %p51, %p52
      %p54 = scmp.ne.s32.totalorder %s43, %s46
      %p55 = scmp.eq.s32.totalorder %s24, 1
      %p56 = por %p54, %p55
      %p57 = scmp.ne.s32.totalorder %s46, %s47
      %p58 = scmp.eq.s32.totalorder %s24, 0
      %p59 = por %p57, %p58
      %p60 = scmp.ne.s32.totalorder %s46, %s47
      %p61 = scmp.eq.s32.totalorder %s25, 1
      %p62 = por %p60, %p61
      %p64 = scmp.ne.s32.totalorder %s47, %s63
      %p65 = scmp.eq.s32.totalorder %s25, 0
      %p66 = por %p64, %p65
      %s67 = ssub.s32 %s26, %s38
      %s68 = ssub.s32 %s27, %s34
      %s69 = sor.u32 %s67, %s68
      %p70 = scmp.eq.s32.totalorder %s69, 0
      %s72 = sadd.s32 %s71, 1
      %s73 = scalar_select %p70, %s71, %s72
      %p76 = pneg %p70
      %p77 = scmp.eq.s32.totalorder %s19, 1
      %p78 = por %p76, %p77
      %p79 = scmp.ne.s32.totalorder %s71, %s74
      %p80 = scmp.eq.s32.totalorder %s19, 0
      %p81 = por %p79, %p80
      %p82 = scmp.ne.s32.totalorder %s71, %s74
      %p83 = scmp.eq.s32.totalorder %s24, 1
      %p84 = por %p82, %p83
      %p85 = scmp.ne.s32.totalorder %s74, %s75
      %p86 = scmp.eq.s32.totalorder %s24, 0
      %p87 = por %p85, %p86
      %p88 = scmp.ne.s32.totalorder %s74, %s75
      %p89 = scmp.eq.s32.totalorder %s25, 1
      %p90 = por %p88, %p89
      %p92 = scmp.ne.s32.totalorder %s75, %s91
      %p93 = scmp.eq.s32.totalorder %s25, 0
      %p94 = por %p92, %p93
      %s96 = sadd.s32 %s95, 1
      %p99 = scmp.eq.s32.totalorder %s19, 1
      %p100 = scmp.ne.s32.totalorder %s95, %s97
      %p101 = scmp.eq.s32.totalorder %s19, 0
      %p102 = por %p100, %p101
      %p103 = scmp.ne.s32.totalorder %s95, %s97
      %p104 = scmp.eq.s32.totalorder %s24, 1
      %p105 = por %p103, %p104
      %p106 = scmp.ne.s32.totalorder %s97, %s98
      %p107 = scmp.eq.s32.totalorder %s24, 0
      %p108 = por %p106, %p107
      %p109 = scmp.ne.s32.totalorder %s97, %s98
      %p110 = scmp.eq.s32.totalorder %s25, 1
      %p111 = por %p109, %p110
      %p113 = scmp.ne.s32.totalorder %s98, %s112
      %p114 = scmp.eq.s32.totalorder %s25, 0
      %p115 = por %p113, %p114
      %s117 = sadd.s32 %s116, 1
      %p120 = scmp.eq.s32.totalorder %s19, 1
      %p121 = scmp.ne.s32.totalorder %s116, %s118
      %p122 = scmp.eq.s32.totalorder %s19, 0
      %p123 = por %p121, %p122
      %p124 = scmp.ne.s32.totalorder %s116, %s118
      %p125 = scmp.eq.s32.totalorder %s24, 1
      %p126 = por %p124, %p125
      %p127 = scmp.ne.s32.totalorder %s118, %s119
      %p128 = scmp.eq.s32.totalorder %s24, 0
      %p129 = por %p127, %p128
      %p130 = scmp.ne.s32.totalorder %s118, %s119
      %p131 = scmp.eq.s32.totalorder %s25, 1
      %p132 = por %p130, %p131
      %p134 = scmp.ne.s32.totalorder %s119, %s133
      %p135 = scmp.eq.s32.totalorder %s25, 0
      %p136 = por %p134, %p135
      %s137 = ssub.s32 %s26, %s38
      %s138 = ssub.s32 %s27, %s34
      %s139 = sor.u32 %s137, %s138
      %p140 = scmp.eq.s32.totalorder %s139, 0
      %s142 = sadd.s32 %s141, 1
      %s143 = scalar_select %p140, %s141, %s142
      %p146 = pneg %p140
      %p147 = scmp.eq.s32.totalorder %s19, 1
      %p148 = por %p146, %p147
      %p149 = scmp.ne.s32.totalorder %s141, %s144
      %p150 = scmp.eq.s32.totalorder %s19, 0
      %p151 = por %p149, %p150
      %p152 = scmp.ne.s32.totalorder %s141, %s144
      %p153 = scmp.eq.s32.totalorder %s24, 1
      %p154 = por %p152, %p153
      %p155 = scmp.ne.s32.totalorder %s144, %s145
      %p156 = scmp.eq.s32.totalorder %s24, 0
      %p157 = por %p155, %p156
      %p158 = scmp.ne.s32.totalorder %s144, %s145
      %p159 = scmp.eq.s32.totalorder %s25, 1
      %p160 = por %p158, %p159
      %p162 = scmp.ne.s32.totalorder %s145, %s161
      %p163 = scmp.eq.s32.totalorder %s25, 0
      %p164 = por %p162, %p163
      %p165 = scmp.le.s32.totalorder 1, %s19
      %p166 = scmp.lt.s32.totalorder %s19, 3
      %p167 = pnand %p165, %p166
      %p168 = pneg %p167
      // Predicated region
      $region9: #{tpu_custom_call.1} parent=5 // pred_check
        _
      $region10: #{tpu_custom_call.1} parent=5 // pred_check_branch
        %170 = sbr.rel (%p167) target = $region12
      $region11: #{tpu_custom_call.1} parent=5 // pred_region
        %s171 = ssub.s32 %s19, 1
        // Predicated region
        $region13: #{tpu_custom_call.1} parent=11 // pred_check
          %p172 = pneg %p108
        $region14: #{tpu_custom_call.1} parent=11 // pred_check_branch
          %174 = sbr.rel (%p172) target = $region16
        $region15: #{tpu_custom_call.1} parent=11 // pred_region
          _
        $region16: #{tpu_custom_call.1} parent=11 // pred_fallthru
          _
        // Predicated region
        $region17: #{tpu_custom_call.1} parent=11 // pred_check
          %p175 = pneg %p129
        $region18: #{tpu_custom_call.1} parent=11 // pred_check_branch
          %177 = sbr.rel (%p175) target = $region20
        $region19: #{tpu_custom_call.1} parent=11 // pred_region
          _
        $region20: #{tpu_custom_call.1} parent=11 // pred_fallthru
          _
      $region12: #{tpu_custom_call.1} parent=5 // pred_fallthru
        _
      %p178 = scmp.lt.s32.totalorder %s19, 2
      // Predicated region
      $region21: #{tpu_custom_call.1} parent=5 // pred_check
        %p179 = pneg %p178
      $region22: #{tpu_custom_call.1} parent=5 // pred_check_branch
        %181 = sbr.rel (%p179) target = $region24
      $region23: #{tpu_custom_call.1} parent=5 // pred_region
        // Predicated region
        $region25: #{tpu_custom_call.1} parent=23 // pred_check
          %p182 = pneg %p53
        $region26: #{tpu_custom_call.1} parent=23 // pred_check_branch
          %184 = sbr.rel (%p182) target = $region28
        $region27: #{tpu_custom_call.1} parent=23 // pred_region
          %s185 = sand.u32 %s43, 1
          %s186 = scalar_lea.sflag [#allocation3], %s185
          %s187 = sand.u32 %s43, 1
          %s188 = smul.addr %s187, 8
          %s189 = scalar_lea.vmem [#allocation2], %s188
          %s190 = smul.u32 2, %s27
          %s192 = ssub.s32 128, 128
          %193 = vsyncadd %s186, %s192
          %s194 = smul.addr %s26, 2
          %s195 = sadd.s32 %s190, %s194
          %s196 = smul.addr %s195, 64
          %s197 = scalar_lea.hbm %s0, %s196
          %s199 = sshll.u32 %s189, 4
          %s200 = int_to_ptr.vmem [resolvable:$true] %s199
          %202 = dma.hbm_to_vmem [thread:$0]  %s197, 128, %s200, %s186
        $region28: #{tpu_custom_call.1} parent=23 // pred_fallthru
          _
        // Predicated region
        $region29: #{tpu_custom_call.1} parent=23 // pred_check
          %p203 = pneg %p81
        $region30: #{tpu_custom_call.1} parent=23 // pred_check_branch
          %205 = sbr.rel (%p203) target = $region32
        $region31: #{tpu_custom_call.1} parent=23 // pred_region
          %s206 = sand.u32 %s71, 1
          %s207 = scalar_lea.sflag [#allocation6], %s206
          %s208 = sand.u32 %s71, 1
          %s209 = smul.addr %s208, 8
          %s210 = scalar_lea.vmem [#allocation5], %s209
          %s211 = smul.u32 2, %s27
          %s213 = ssub.s32 128, 128
          %214 = vsyncadd %s207, %s213
          %s215 = smul.addr %s26, 2
          %s216 = sadd.s32 %s211, %s215
          %s217 = smul.addr %s216, 64
          %s218 = scalar_lea.hbm %s1, %s217
          %s220 = sshll.u32 %s210, 4
          %s221 = int_to_ptr.vmem [resolvable:$true] %s220
          %223 = dma.hbm_to_vmem [thread:$0]  %s218, 128, %s221, %s207
        $region32: #{tpu_custom_call.1} parent=23 // pred_fallthru
          _
      $region24: #{tpu_custom_call.1} parent=5 // pred_fallthru
        _
      %p224 = scmp.le.s32.totalorder 1, %s19
      %p225 = scmp.lt.s32.totalorder %s19, 3
      %p226 = pnand %p224, %p225
      %p227 = pneg %p226
      // Predicated region
      $region33: #{tpu_custom_call.1} parent=5 // pred_check
        _
      $region34: #{tpu_custom_call.1} parent=5 // pred_check_branch
        %229 = sbr.rel (%p226) target = $region36
      $region35: #{tpu_custom_call.1} parent=5 // pred_region
        %s230 = ssub.s32 %s19, 1
        %s231 = sand.u32 %s46, 1
        %s232 = scalar_lea.sflag [#allocation3], %s231
        %s233 = sand.u32 %s46, 1
        %s234 = smul.addr %s233, 8
        %s235 = scalar_lea.vmem [#allocation2], %s234
        // Predicated region
        $region37: #{tpu_custom_call.1} parent=35 // pred_check
          %p236 = pneg %p59
        $region38: #{tpu_custom_call.1} parent=35 // pred_check_branch
          %238 = sbr.rel (%p236) target = $region40
        $region39: #{tpu_custom_call.1} parent=35 // pred_region
          %239 = dma.done %s232, 128
        $region40: #{tpu_custom_call.1} parent=35 // pred_fallthru
          _
        %s240 = sand.u32 %s74, 1
        %s241 = scalar_lea.sflag [#allocation6], %s240
        %s242 = sand.u32 %s74, 1
        %s243 = smul.addr %s242, 8
        %s244 = scalar_lea.vmem [#allocation5], %s243
        // Predicated region
        $region41: #{tpu_custom_call.1} parent=35 // pred_check
          %p245 = pneg %p87
        $region42: #{tpu_custom_call.1} parent=35 // pred_check_branch
          %247 = sbr.rel (%p245) target = $region44
        $region43: #{tpu_custom_call.1} parent=35 // pred_region
          %248 = dma.done %s241, 128
        $region44: #{tpu_custom_call.1} parent=35 // pred_fallthru
          _
        %s249 = sand.u32 %s46, 1
        %s250 = scalar_lea.sflag [#allocation3], %s249
        %s251 = sand.u32 %s46, 1
        %s252 = smul.addr %s251, 8
        %s253 = scalar_lea.vmem [#allocation2], %s252
        %p254 = pneg %p59
        %p255 = pneg %p56
        %s256 = sand.u32 %s74, 1
        %s257 = scalar_lea.sflag [#allocation6], %s256
        %s258 = sand.u32 %s74, 1
        %s259 = smul.addr %s258, 8
        %s260 = scalar_lea.vmem [#allocation5], %s259
        %p261 = pneg %p87
        %p262 = pneg %p84
        %p263 = pneg %p108
        %p264 = pneg %p105
        %p265 = pneg %p129
        %p266 = pneg %p126
        %p267 = pneg %p157
        %p268 = pneg %p154
        %s269 = sand.u32 %s144, 1
        %s270 = scalar_lea.sflag [#allocation4], %s269
        %s271 = sand.u32 %s144, 1
        %s272 = smul.addr %s271, 8
        %s273 = scalar_lea.vmem [#allocation7], %s272
        %s274 = smul.u32 2, %s29
        %s275 = smul.u32 2, %s29
        %s276 = smul.u32 2, %s29
        %v277 = vld [vmem:[%s2] sm:$0xf]
        %v278 = vld [vmem:[%s235] sm:$0xff]
        %v279 = vld [vmem:[%s3] sm:$0xf]
        %v280 = vld [vmem:[%s244] sm:$0xff]
        %v282 = vcombine.high %v280, %v280
        %vm283 = vcmask 31744
        %v285 = vsel %vm283, %v279, 0
        %vm287 = vcmask 1043456
        %v288 = vsel %vm287, %v280, 0
        %v290 = vsel %vm287, %v282, 0
        %292 = vmatprep.subr.mxu0 %v290
        %293 = vmatpush1.msra.mxu0 %v288
        %294 = vmatprep.subr.mxu0 0.0
        %295 = vmatpush1.msra.mxu0 0.0
        %296 = vmatprep.subr.mxu0 0.0
        %297 = vmatpush1.msra.mxu0 0.0
        %298 = vmatprep.subr.mxu0 0.0
        %299 = vmatpush1.msra.mxu0 0.0
        %300 = vmatprep.subr.mxu0 0.0
        %301 = vmatpush1.msra.mxu0 0.0
        %302 = vmatprep.subr.mxu0 0.0
        %303 = vmatpush1.msra.mxu0 0.0
        %304 = vmatprep.subr.mxu0 0.0
        %305 = vmatpush1.msra.mxu0 0.0
        %306 = vmatprep.subr.mxu0 0.0
        %307 = vmatpush1.msra.mxu0 0.0
        %308 = vmatprep.subr.mxu0 0.0
        %309 = vmatpush1.msra.mxu0 0.0
        %310 = vmatprep.subr.mxu0 0.0
        %311 = vmatpush1.msra.mxu0 0.0
        %312 = vmatprep.subr.mxu0 0.0
        %313 = vmatpush1.msra.mxu0 0.0
        %314 = vmatprep.subr.mxu0 0.0
        %315 = vmatpush1.msra.mxu0 0.0
        %316 = vmatprep.subr.mxu0 0.0
        %317 = vmatpush1.msra.mxu0 0.0
        %318 = vmatprep.subr.mxu0 0.0
        %319 = vmatpush1.msra.mxu0 0.0
        %320 = vmatprep.subr.mxu0 0.0
        %321 = vmatpush1.msra.mxu0 0.0
        %322 = vmatprep.subr.mxu0 0.0
        %323 = vmatpush1.msra.mxu0 0.0
        %324 = vmatprep.subr.mxu0 0.0
        %325 = vmatpush1.msra.mxu0 0.0
        %326 = vmatprep.subr.mxu0 0.0
        %327 = vmatpush1.msra.mxu0 0.0
        %328 = vmatprep.subr.mxu0 0.0
        %329 = vmatpush1.msra.mxu0 0.0
        %330 = vmatprep.subr.mxu0 0.0
        %331 = vmatpush1.msra.mxu0 0.0
        %332 = vmatprep.subr.mxu0 0.0
        %333 = vmatpush1.msra.mxu0 0.0
        %334 = vmatprep.subr.mxu0 0.0
        %335 = vmatpush1.msra.mxu0 0.0
        %336 = vmatprep.subr.mxu0 0.0
        %337 = vmatpush1.msra.mxu0 0.0
        %338 = vmatprep.subr.mxu0 0.0
        %339 = vmatpush1.msra.mxu0 0.0
        %340 = vmatprep.subr.mxu0 0.0
        %341 = vmatpush1.msra.mxu0 0.0
        %342 = vmatprep.subr.mxu0 0.0
        %343 = vmatpush1.msra.mxu0 0.0
        %344 = vmatprep.subr.mxu0 0.0
        %345 = vmatpush1.msra.mxu0 0.0
        %346 = vmatprep.subr.mxu0 0.0
        %347 = vmatpush1.msra.mxu0 0.0
        %348 = vmatprep.subr.mxu0 0.0
        %349 = vmatpush1.msra.mxu0 0.0
        %350 = vmatprep.subr.mxu0 0.0
        %351 = vmatpush1.msra.mxu0 0.0
        %352 = vmatprep.subr.mxu0 0.0
        %353 = vmatpush1.msra.mxu0 0.0
        %354 = vmatprep.subr.mxu0 0.0
        %355 = vmatpush1.msra.mxu0 0.0
        %356 = vmatprep.mubr.f32.mxu0 0.0
        %357 = vmatmul.mubr.f32.gmra.mrb[0].mxu0 %v285
        %v358 = vpop.f32.mrb[0].mxu0
        %v359 = vadd.f32 0.0, %v358
        %v360 = vpop.f32.mrb[0].mxu0
        %v361 = vadd.f32 0.0, %v360
        %362 = vdwg.mxu0
        %v364 = vcombine.high %v278, %v278
        %v366 = vsel %vm283, %v277, 0
        %v368 = vsel %vm287, %v278, 0
        %v370 = vsel %vm287, %v364, 0
        %372 = vmatprep.subr.mxu0 %v370
        %373 = vmatpush1.msra.mxu0 %v368
        %374 = vmatprep.subr.mxu0 0.0
        %375 = vmatpush1.msra.mxu0 0.0
        %376 = vmatprep.subr.mxu0 0.0
        %377 = vmatpush1.msra.mxu0 0.0
        %378 = vmatprep.subr.mxu0 0.0
        %379 = vmatpush1.msra.mxu0 0.0
        %380 = vmatprep.subr.mxu0 0.0
        %381 = vmatpush1.msra.mxu0 0.0
        %382 = vmatprep.subr.mxu0 0.0
        %383 = vmatpush1.msra.mxu0 0.0
        %384 = vmatprep.subr.mxu0 0.0
        %385 = vmatpush1.msra.mxu0 0.0
        %386 = vmatprep.subr.mxu0 0.0
        %387 = vmatpush1.msra.mxu0 0.0
        %388 = vmatprep.subr.mxu0 0.0
        %389 = vmatpush1.msra.mxu0 0.0
        %390 = vmatprep.subr.mxu0 0.0
        %391 = vmatpush1.msra.mxu0 0.0
        %392 = vmatprep.subr.mxu0 0.0
        %393 = vmatpush1.msra.mxu0 0.0
        %394 = vmatprep.subr.mxu0 0.0
        %395 = vmatpush1.msra.mxu0 0.0
        %396 = vmatprep.subr.mxu0 0.0
        %397 = vmatpush1.msra.mxu0 0.0
        %398 = vmatprep.subr.mxu0 0.0
        %399 = vmatpush1.msra.mxu0 0.0
        %400 = vmatprep.subr.mxu0 0.0
        %401 = vmatpush1.msra.mxu0 0.0
        %402 = vmatprep.subr.mxu0 0.0
        %403 = vmatpush1.msra.mxu0 0.0
        %404 = vmatprep.subr.mxu0 0.0
        %405 = vmatpush1.msra.mxu0 0.0
        %406 = vmatprep.subr.mxu0 0.0
        %407 = vmatpush1.msra.mxu0 0.0
        %408 = vmatprep.subr.mxu0 0.0
        %409 = vmatpush1.msra.mxu0 0.0
        %410 = vmatprep.subr.mxu0 0.0
        %411 = vmatpush1.msra.mxu0 0.0
        %412 = vmatprep.subr.mxu0 0.0
        %413 = vmatpush1.msra.mxu0 0.0
        %414 = vmatprep.subr.mxu0 0.0
        %415 = vmatpush1.msra.mxu0 0.0
        %416 = vmatprep.subr.mxu0 0.0
        %417 = vmatpush1.msra.mxu0 0.0
        %418 = vmatprep.subr.mxu0 0.0
        %419 = vmatpush1.msra.mxu0 0.0
        %420 = vmatprep.subr.mxu0 0.0
        %421 = vmatpush1.msra.mxu0 0.0
        %422 = vmatprep.subr.mxu0 0.0
        %423 = vmatpush1.msra.mxu0 0.0
        %424 = vmatprep.subr.mxu0 0.0
        %425 = vmatpush1.msra.mxu0 0.0
        %426 = vmatprep.subr.mxu0 0.0
        %427 = vmatpush1.msra.mxu0 0.0
        %428 = vmatprep.subr.mxu0 0.0
        %429 = vmatpush1.msra.mxu0 0.0
        %430 = vmatprep.subr.mxu0 0.0
        %431 = vmatpush1.msra.mxu0 0.0
        %432 = vmatprep.subr.mxu0 0.0
        %433 = vmatpush1.msra.mxu0 0.0
        %434 = vmatprep.subr.mxu0 0.0
        %435 = vmatpush1.msra.mxu0 0.0
        %436 = vmatprep.mubr.f32.mxu0 0.0
        %437 = vmatmul.mubr.f32.gmra.mrb[0].mxu0 %v366
        %v438 = vpop.f32.mrb[0].mxu0
        %v439 = vadd.f32 %v359, %v438
        %v440 = vpop.f32.mrb[0].mxu0
        %v441 = vadd.f32 %v361, %v440
        %442 = vdwg.mxu0
        %v445 = vcombine.low %v439, %v441
        %447 = vst [vmem:[%s273] sm:$0xff] %v445
        %s448 = sand.u32 %s144, 1
        %s449 = scalar_lea.sflag [#allocation4], %s448
        %s450 = sand.u32 %s144, 1
        %s451 = smul.addr %s450, 8
        %s452 = scalar_lea.vmem [#allocation7], %s451
        // Predicated region
        $region45: #{tpu_custom_call.1} parent=35 // pred_check
          %p453 = pneg %p154
        $region46: #{tpu_custom_call.1} parent=35 // pred_check_branch
          %455 = sbr.rel (%p453) target = $region48
        $region47: #{tpu_custom_call.1} parent=35 // pred_region
          %s456 = smul.u32 2, %s29
          %s458 = ssub.s32 128, 128
          %459 = vsyncadd %s449, %s458
          %s460 = smul.addr %s28, 2
          %s461 = sadd.s32 %s456, %s460
          %s462 = smul.addr %s461, 64
          %s463 = scalar_lea.hbm %s4, %s462
          %s465 = sshll.u32 %s452, 4
          %s466 = int_to_ptr.vmem [resolvable:$true] %s465
          %468 = dma.vmem_to_hbm [thread:$0]  %s466, 128, %s463, %s449
        $region48: #{tpu_custom_call.1} parent=35 // pred_fallthru
          _
      $region36: #{tpu_custom_call.1} parent=5 // pred_fallthru
        _
      %p469 = scmp.le.s32.totalorder 2, %s19
      // Predicated region
      $region49: #{tpu_custom_call.1} parent=5 // pred_check
        %p470 = pneg %p469
      $region50: #{tpu_custom_call.1} parent=5 // pred_check_branch
        %472 = sbr.rel (%p470) target = $region52
      $region51: #{tpu_custom_call.1} parent=5 // pred_region
        %s473 = ssub.s32 %s19, 2
        // Predicated region
        $region53: #{tpu_custom_call.1} parent=51 // pred_check
          %p474 = pneg %p160
        $region54: #{tpu_custom_call.1} parent=51 // pred_check_branch
          %476 = sbr.rel (%p474) target = $region56
        $region55: #{tpu_custom_call.1} parent=51 // pred_region
          %s477 = sand.u32 %s145, 1
          %s478 = scalar_lea.sflag [#allocation4], %s477
          %s479 = sand.u32 %s145, 1
          %s480 = smul.addr %s479, 8
          %s481 = scalar_lea.vmem [#allocation7], %s480
          %482 = dma.done %s478, 128
        $region56: #{tpu_custom_call.1} parent=51 // pred_fallthru
          _
      $region52: #{tpu_custom_call.1} parent=5 // pred_fallthru
        _
    $region6: #{tpu_custom_call.1} parent=1 // loop_footer
      %s23 = sadd.s32 1, %s19
    $region7: #{tpu_custom_call.1} parent=1 // loop_footer_branch
      %18 = sbr.rel target = $region3
    $region8: #{tpu_custom_call.1} parent=1 // loop_exit
      _
    %483 = vsyncpa [#allocation3], 1
    %s484 = scalar_lea.sflag [#allocation3], 1
    %485 = vsyncpa %s484, 1
    %486 = vsyncpa [#allocation6], 1
    %s487 = scalar_lea.sflag [#allocation6], 1
    %488 = vsyncpa %s487, 1
    %489 = vsyncpa [#allocation4], 1
    %s490 = scalar_lea.sflag [#allocation4], 1
    %491 = vsyncpa %s490, 1

</llo_original>
